<compile_context>
chip_gen: v5e
topology: v5e:2x2
jax: 0.10.0
libtpu: 0.0.40
codegen_flags: <defaults>
</compile_context>

<pallas_src>
from functools import partial

import jax
import jax.numpy as jnp
from jax.experimental import pallas as pl
from jax.experimental.pallas import tpu as pltpu


def _round_up(x, m):
    return ((x + m - 1) // m) * m


def _pick_tile_config():
    """Generation-aware (target voxel tile, vmem_limit_bytes)."""
    try:
        kind = jax.devices()[0].device_kind.lower()
    except Exception:
        kind = ""
    if "v7" in kind or "7x" in kind:
        # v7x: 64 MiB VMEM/TC, ~3.2 TB/s HBM -> big tiles but tight VMEM budget.
        return 16384, 48 * 1024 * 1024
    if "v6" in kind or "trillium" in kind:
        # v6e: 128 MiB VMEM, ~1.4 TB/s HBM.
        return 8192, 64 * 1024 * 1024
    if "v5 lite" in kind or "v5e" in kind or "v5litepod" in kind:
        # v5e: slower HBM; 4096 already ~80% of roofline.
        return 4096, 64 * 1024 * 1024
    return 4096, None  # conservative fallback (leave default scoped VMEM limit)


def _update_net_kernel(x_ref, w1_ref, b1_ref, w2_ref, b2_ref, w3_ref, o_ref,
                       *, nb, n_chunks, tc, compute_dtype):
    # x_ref : (nb, C_in, tv)   voxels on lanes, tv = n_chunks * tc
    # w1_ref: (H1, C_in)  b1_ref: (H1, 1)     (compute dtype)
    # w2_ref: (H2, H1)    b2_ref: (H2, 1)
    # w3_ref: (C_out, H2)
    # o_ref : (nb, C_out, tv)
    w1 = w1_ref[...]
    b1 = b1_ref[...]
    w2 = w2_ref[...]
    b2 = b2_ref[...]
    w3 = w3_ref[...]
    for b in range(nb):                      # static unroll over packed batch elems
        for c in range(n_chunks):            # static unroll over lane chunks
            sl = pl.ds(c * tc, tc)
            x = x_ref[b, :, sl].astype(compute_dtype)            # (C_in, tc)
            h1 = jnp.dot(w1, x, preferred_element_type=jnp.float32)
            h1 = jnp.maximum(h1.astype(compute_dtype) + b1, 0)   # bias+ReLU in compute dtype
            h2 = jnp.dot(w2, h1, preferred_element_type=jnp.float32)
            h2 = jnp.maximum(h2.astype(compute_dtype) + b2, 0)
            out = jnp.dot(w3, h2, preferred_element_type=jnp.float32)
            o_ref[b, :, sl] = out.astype(o_ref.dtype)


def smaller_voxel_update_net(x_ncdhw, params, *, tv=None,
                             compute_dtype=jnp.bfloat16,
                             out_dtype=jnp.float32,
                             inner_chunk=512,
                             vmem_limit_bytes=None):
    """Full forward matching the PyTorch module.

    x_ncdhw: (N, 3*num_channels, D, H, W), any float dtype (bf16 input halves HBM traffic)
    params : (w1, b1, w2, b2, w3) with w_i stored as (C_in_i, C_out_i), b_i (1, C_out_i)
    returns: (N, num_channels, D, H, W) in out_dtype

    tv            : target voxel tile (lanes); None -> generation-aware default.
    compute_dtype : dtype fed to the MXU / VPU elementwise (bf16 on v6e/v7x);
                    matmul accumulation is always f32.
    out_dtype     : output dtype (f32 default; bf16 if downstream tolerates it).
    """
    w1, b1, w2, b2, w3 = params
    N, C_in, D, H, W = x_ncdhw.shape
    H1, H2, C_out = w1.shape[1], w2.shape[1], w3.shape[1]
    V = D * H * W

    tv_target, vmem_default = _pick_tile_config()
    if tv is None:
        tv = tv_target
    if vmem_limit_bytes is None:
        vmem_limit_bytes = vmem_default

    # One-time weight prep: transpose to (out, in), cast to compute dtype.
    w1t = jnp.asarray(w1.T, compute_dtype)                 # (H1, C_in)
    w2t = jnp.asarray(w2.T, compute_dtype)                 # (H2, H1)
    w3t = jnp.asarray(w3.T, compute_dtype)                 # (C_out, H2)
    b1c = jnp.asarray(b1.reshape(-1, 1), compute_dtype)    # (H1, 1)
    b2c = jnp.asarray(b2.reshape(-1, 1), compute_dtype)    # (H2, 1)

    # Pure view: NCDHW -> (N, C_in, V). No transpose, no pad, no extra HBM pass.
    x_r = x_ncdhw.reshape(N, C_in, V)

    # Lane-dense voxel tile: multiple of 128, capped by the (128-rounded) voxel count.
    tv_eff = min(int(tv), _round_up(V, 128))
    tv_eff = max(128, (tv_eff // 128) * 128)

    # Pack several batch elements per grid step when one v-tile already covers V.
    nb_cap = max(1, int(tv) // tv_eff)
    nb = 1
    for d in range(min(N, nb_cap), 0, -1):    # largest divisor of N <= cap
        if N % d == 0:
            nb = d
            break

    # Inner compute chunk (lanes): keeps h1/h2 near the vreg file instead of VMEM.
    tc = tv_eff
    for cand in (int(inner_chunk), 512, 256, 128):
        if 0 < cand <= tv_eff and tv_eff % cand == 0:
            tc = cand
            break
    n_chunks = tv_eff // tc

    # Ragged V handled by a partial last lane-block (masked read/write), no jnp.pad.
    grid = (N // nb, pl.cdiv(V, tv_eff))

    in_bytes = jnp.dtype(x_r.dtype).itemsize
    o_bytes = jnp.dtype(out_dtype).itemsize
    w_bytes = (w1t.size + w2t.size + w3t.size) * jnp.dtype(compute_dtype).itemsize
    cost = pl.CostEstimate(
        flops=int(2 * N * V * (C_in * H1 + H1 * H2 + H2 * C_out)),
        transcendentals=0,
        bytes_accessed=int(N * V * (C_in * in_bytes + C_out * o_bytes) + w_bytes),
    )

    out = pl.pallas_call(
        partial(_update_net_kernel, nb=nb, n_chunks=n_chunks, tc=tc,
                compute_dtype=compute_dtype),
        out_shape=jax.ShapeDtypeStruct((N, C_out, V), out_dtype),
        grid_spec=pltpu.PrefetchScalarGridSpec(
            num_scalar_prefetch=0,
            grid=grid,
            in_specs=[
                # activations: nb batch elements, all channels, tv voxels on lanes
                pl.BlockSpec((nb, C_in, tv_eff), lambda n, v: (n, 0, v)),
                # weights / biases: constant blocks, fetched once, VMEM-resident
                pl.BlockSpec((H1, C_in), lambda n, v: (0, 0)),
                pl.BlockSpec((H1, 1), lambda n, v: (0, 0)),
                pl.BlockSpec((H2, H1), lambda n, v: (0, 0)),
                pl.BlockSpec((H2, 1), lambda n, v: (0, 0)),
                pl.BlockSpec((C_out, H2), lambda n, v: (0, 0)),
            ],
            out_specs=pl.BlockSpec((nb, C_out, tv_eff), lambda n, v: (n, 0, v)),
        ),
        compiler_params=pltpu.CompilerParams(
            dimension_semantics=("parallel", "parallel"),
            vmem_limit_bytes=vmem_limit_bytes,
        ),
        cost_estimate=cost,
    )(x_r, w1t, b1c, w2t, b2c, w3t)

    return out.reshape(N, C_out, D, H, W)


def init_params(key, num_channels=16, channel_dims=(64, 64), normal_std=0.02):
    """Deterministic init mirroring the module: normal(std) weights, zero biases,
    final conv has no bias. Weights stored as (C_in, C_out)."""
    c_in = num_channels * 3
    k1, k2, k3 = jax.random.split(key, 3)
    w1 = jax.random.normal(k1, (c_in, channel_dims[0]), jnp.float32) * normal_std
    b1 = jnp.zeros((1, channel_dims[0]), jnp.float32)
    w2 = jax.random.normal(k2, (channel_dims[0], channel_dims[1]), jnp.float32) * normal_std
    b2 = jnp.zeros((1, channel_dims[1]), jnp.float32)
    w3 = jax.random.normal(k3, (channel_dims[1], num_channels), jnp.float32) * normal_std
    return (w1, b1, w2, b2, w3)


def reference_forward(x_ncdhw, params):
    """Plain-JAX f32 reference (same math) for a sanity check."""
    w1, b1, w2, b2, w3 = params
    x = jnp.moveaxis(x_ncdhw, 1, -1)                      # N,D,H,W,C
    h = jnp.maximum(x @ w1 + b1.reshape(-1), 0.0)
    h = jnp.maximum(h @ w2 + b2.reshape(-1), 0.0)
    o = h @ w3
    return jnp.moveaxis(o, -1, 1)                         # N,C,D,H,W


if __name__ == "__main__":
    key = jax.random.PRNGKey(0)
    kx, kp = jax.random.split(key)

    num_channels = 16
    C_in = num_channels * 3                   # 48
    params = init_params(kp, num_channels=num_channels, channel_dims=(64, 64))

    # 1) f32 compute path, V=512, N=2 -> exercises batch packing (nb=2), tight check.
    x = jax.random.normal(kx, (2, C_in, 8, 8, 8), jnp.float32)
    ref = reference_forward(x, params)
    out_f32 = jax.block_until_ready(
        smaller_voxel_update_net(x, params, tv=1024, compute_dtype=jnp.float32))
    assert out_f32.shape == (2, num_channels, 8, 8, 8)
    assert jnp.allclose(out_f32, ref, atol=2e-5, rtol=1e-4), "f32 path mismatch"

    # 2) bf16 MXU/VPU path (perf config) with generation-default tile size.
    out_bf16 = jax.block_until_ready(
        smaller_voxel_update_net(x, params, compute_dtype=jnp.bfloat16))
    err = float(jnp.max(jnp.abs(out_bf16 - ref)))
    scale = float(jnp.max(jnp.abs(ref))) + 1e-8
    assert err / scale < 0.05, f"bf16 relative error too large: {err / scale}"

    # 3) Ragged voxel count (V=210): partial last lane block, no pad/slice in HBM.
    x2 = jax.random.normal(kx, (1, C_in, 5, 6, 7), jnp.float32)
    ref2 = reference_forward(x2, params)
    out2 = jax.block_until_ready(
        smaller_voxel_update_net(x2, params, compute_dtype=jnp.float32))
    assert out2.shape == (1, num_channels, 5, 6, 7)
    assert jnp.allclose(out2, ref2, atol=2e-5, rtol=1e-4), "ragged-V path mismatch"

    # 4) N=3 with a packing cap of 2 -> nb falls back to a divisor (nb=1), V=256.
    x3 = jax.random.normal(kx, (3, C_in, 4, 8, 8), jnp.float32)
    ref3 = reference_forward(x3, params)
    out3 = jax.block_until_ready(
        smaller_voxel_update_net(x3, params, tv=512, compute_dtype=jnp.float32))
    assert jnp.allclose(out3, ref3, atol=2e-5, rtol=1e-4), "divisor-nb path mismatch"

    print("KERNEL_OK")
</pallas_src>

<mosaic_0001>
module attributes {stable_mosaic.version = 11 : i64} {
  func.func @_update_net_kernel(%arg0: i32, %arg1: i32, %arg2: memref<2x48x512xf32, #tpu.memory_space<vmem>>, %arg3: memref<64x48xf32, #tpu.memory_space<vmem>>, %arg4: memref<64x1xf32, #tpu.memory_space<vmem>>, %arg5: memref<64x64xf32, #tpu.memory_space<vmem>>, %arg6: memref<64x1xf32, #tpu.memory_space<vmem>>, %arg7: memref<16x64xf32, #tpu.memory_space<vmem>>, %arg8: memref<2x16x512xf32, #tpu.memory_space<vmem>>) attributes {dimension_semantics = [#tpu.dimension_semantics<parallel>, #tpu.dimension_semantics<parallel>], iteration_bounds = array<i64: 1, 1>, scalar_prefetch = 0 : i64, scratch_operands = 0 : i64, tpu.core_type = #tpu.core_type<tc>, window_params = [{transform_indices = @transform_0, window_bounds = array<i64: 2, 48, 512>}, {pipeline_mode = #tpu.pipeline_mode<synchronous>, transform_indices = @transform_1, window_bounds = array<i64: 64, 48>}, {pipeline_mode = #tpu.pipeline_mode<synchronous>, transform_indices = @transform_2, window_bounds = array<i64: 64, 1>}, {pipeline_mode = #tpu.pipeline_mode<synchronous>, transform_indices = @transform_3, window_bounds = array<i64: 64, 64>}, {pipeline_mode = #tpu.pipeline_mode<synchronous>, transform_indices = @transform_4, window_bounds = array<i64: 64, 1>}, {pipeline_mode = #tpu.pipeline_mode<synchronous>, transform_indices = @transform_5, window_bounds = array<i64: 16, 64>}, {transform_indices = @transform_6, window_bounds = array<i64: 2, 16, 512>}]} {
    %c0 = arith.constant 0 : index
    %c0_0 = arith.constant 0 : index
    %0 = vector.load %arg3[%c0, %c0_0] : memref<64x48xf32, #tpu.memory_space<vmem>>, vector<64x48xf32>
    %c0_1 = arith.constant 0 : index
    %c0_2 = arith.constant 0 : index
    %1 = vector.load %arg4[%c0_1, %c0_2] : memref<64x1xf32, #tpu.memory_space<vmem>>, vector<64x1xf32>
    %c0_3 = arith.constant 0 : index
    %c0_4 = arith.constant 0 : index
    %2 = vector.load %arg5[%c0_3, %c0_4] : memref<64x64xf32, #tpu.memory_space<vmem>>, vector<64x64xf32>
    %c0_5 = arith.constant 0 : index
    %c0_6 = arith.constant 0 : index
    %3 = vector.load %arg6[%c0_5, %c0_6] : memref<64x1xf32, #tpu.memory_space<vmem>>, vector<64x1xf32>
    %c0_7 = arith.constant 0 : index
    %c0_8 = arith.constant 0 : index
    %4 = vector.load %arg7[%c0_7, %c0_8] : memref<16x64xf32, #tpu.memory_space<vmem>>, vector<16x64xf32>
    %c0_9 = arith.constant 0 : index
    %c0_10 = arith.constant 0 : index
    %c0_11 = arith.constant 0 : index
    %5 = vector.load %arg2[%c0_9, %c0_10, %c0_11] : memref<2x48x512xf32, #tpu.memory_space<vmem>>, vector<1x48x512xf32>
    %6 = vector.shape_cast %5 : vector<1x48x512xf32> to vector<48x512xf32>
    %cst = arith.constant dense<0.000000e+00> : vector<64x512xf32>
    %7 = tpu.matmul %0, %6, %cst {dimension_numbers = #tpu.dot_dimension_numbers<[1], [0], [0], [1], [0, 0, 1, 1], [], []>} : vector<64x48xf32>, vector<48x512xf32>, vector<64x512xf32> -> vector<64x512xf32>
    %8 = vector.broadcast %1 : vector<64x1xf32> to vector<64x512xf32>
    %9 = arith.addf %7, %8 : vector<64x512xf32>
    %cst_12 = arith.constant 0.000000e+00 : f32
    %10 = vector.broadcast %cst_12 : f32 to vector<64x512xf32>
    %11 = arith.maximumf %9, %10 : vector<64x512xf32>
    %cst_13 = arith.constant dense<0.000000e+00> : vector<64x512xf32>
    %12 = tpu.matmul %2, %11, %cst_13 {dimension_numbers = #tpu.dot_dimension_numbers<[1], [0], [0], [1], [0, 0, 1, 1], [], []>} : vector<64x64xf32>, vector<64x512xf32>, vector<64x512xf32> -> vector<64x512xf32>
    %13 = vector.broadcast %3 : vector<64x1xf32> to vector<64x512xf32>
    %14 = arith.addf %12, %13 : vector<64x512xf32>
    %cst_14 = arith.constant 0.000000e+00 : f32
    %15 = vector.broadcast %cst_14 : f32 to vector<64x512xf32>
    %16 = arith.maximumf %14, %15 : vector<64x512xf32>
    %cst_15 = arith.constant dense<0.000000e+00> : vector<16x512xf32>
    %17 = tpu.matmul %4, %16, %cst_15 {dimension_numbers = #tpu.dot_dimension_numbers<[1], [0], [0], [1], [0, 0, 1, 1], [], []>} : vector<16x64xf32>, vector<64x512xf32>, vector<16x512xf32> -> vector<16x512xf32>
    %c0_16 = arith.constant 0 : index
    %c0_17 = arith.constant 0 : index
    %c0_18 = arith.constant 0 : index
    %18 = vector.load %arg8[%c0_16, %c0_17, %c0_18] : memref<2x16x512xf32, #tpu.memory_space<vmem>>, vector<1x16x512xf32>
    %19 = vector.shape_cast %18 : vector<1x16x512xf32> to vector<16x512xf32>
    %20 = vector.shape_cast %17 : vector<16x512xf32> to vector<1x16x512xf32>
    tpu.vector_store %arg8[%c0_16, %c0_17, %c0_18], %20 {strides = array<i32>} : memref<2x16x512xf32, #tpu.memory_space<vmem>>, vector<1x16x512xf32>,
    %c1 = arith.constant 1 : index
    %c0_19 = arith.constant 0 : index
    %c0_20 = arith.constant 0 : index
    %21 = vector.load %arg2[%c1, %c0_19, %c0_20] : memref<2x48x512xf32, #tpu.memory_space<vmem>>, vector<1x48x512xf32>
    %22 = vector.shape_cast %21 : vector<1x48x512xf32> to vector<48x512xf32>
    %cst_21 = arith.constant dense<0.000000e+00> : vector<64x512xf32>
    %23 = tpu.matmul %0, %22, %cst_21 {dimension_numbers = #tpu.dot_dimension_numbers<[1], [0], [0], [1], [0, 0, 1, 1], [], []>} : vector<64x48xf32>, vector<48x512xf32>, vector<64x512xf32> -> vector<64x512xf32>
    %24 = vector.broadcast %1 : vector<64x1xf32> to vector<64x512xf32>
    %25 = arith.addf %23, %24 : vector<64x512xf32>
    %cst_22 = arith.constant 0.000000e+00 : f32
    %26 = vector.broadcast %cst_22 : f32 to vector<64x512xf32>
    %27 = arith.maximumf %25, %26 : vector<64x512xf32>
    %cst_23 = arith.constant dense<0.000000e+00> : vector<64x512xf32>
    %28 = tpu.matmul %2, %27, %cst_23 {dimension_numbers = #tpu.dot_dimension_numbers<[1], [0], [0], [1], [0, 0, 1, 1], [], []>} : vector<64x64xf32>, vector<64x512xf32>, vector<64x512xf32> -> vector<64x512xf32>
    %29 = vector.broadcast %3 : vector<64x1xf32> to vector<64x512xf32>
    %30 = arith.addf %28, %29 : vector<64x512xf32>
    %cst_24 = arith.constant 0.000000e+00 : f32
    %31 = vector.broadcast %cst_24 : f32 to vector<64x512xf32>
    %32 = arith.maximumf %30, %31 : vector<64x512xf32>
    %cst_25 = arith.constant dense<0.000000e+00> : vector<16x512xf32>
    %33 = tpu.matmul %4, %32, %cst_25 {dimension_numbers = #tpu.dot_dimension_numbers<[1], [0], [0], [1], [0, 0, 1, 1], [], []>} : vector<16x64xf32>, vector<64x512xf32>, vector<16x512xf32> -> vector<16x512xf32>
    %c1_26 = arith.constant 1 : index
    %c0_27 = arith.constant 0 : index
    %c0_28 = arith.constant 0 : index
    %34 = vector.load %arg8[%c1_26, %c0_27, %c0_28] : memref<2x16x512xf32, #tpu.memory_space<vmem>>, vector<1x16x512xf32>
    %35 = vector.shape_cast %34 : vector<1x16x512xf32> to vector<16x512xf32>
    %36 = vector.shape_cast %33 : vector<16x512xf32> to vector<1x16x512xf32>
    tpu.vector_store %arg8[%c1_26, %c0_27, %c0_28], %36 {strides = array<i32>} : memref<2x16x512xf32, #tpu.memory_space<vmem>>, vector<1x16x512xf32>,
    return
  }
  func.func @transform_0(%arg0: i32, %arg1: i32) -> (i32, i32, i32) {
    %c0_i32 = arith.constant 0 : i32
    %c0_i32_0 = arith.constant 0 : i32
    return %arg0, %c0_i32, %arg1 : i32, i32, i32
  }
  func.func @transform_1(%arg0: i32, %arg1: i32) -> (i32, i32) {
    %c0_i32 = arith.constant 0 : i32
    %c0_i32_0 = arith.constant 0 : i32
    %c0_i32_1 = arith.constant 0 : i32
    return %c0_i32, %c0_i32_0 : i32, i32
  }
  func.func @transform_2(%arg0: i32, %arg1: i32) -> (i32, i32) {
    %c0_i32 = arith.constant 0 : i32
    %c0_i32_0 = arith.constant 0 : i32
    %c0_i32_1 = arith.constant 0 : i32
    return %c0_i32, %c0_i32_0 : i32, i32
  }
  func.func @transform_3(%arg0: i32, %arg1: i32) -> (i32, i32) {
    %c0_i32 = arith.constant 0 : i32
    %c0_i32_0 = arith.constant 0 : i32
    %c0_i32_1 = arith.constant 0 : i32
    return %c0_i32, %c0_i32_0 : i32, i32
  }
  func.func @transform_4(%arg0: i32, %arg1: i32) -> (i32, i32) {
    %c0_i32 = arith.constant 0 : i32
    %c0_i32_0 = arith.constant 0 : i32
    %c0_i32_1 = arith.constant 0 : i32
    return %c0_i32, %c0_i32_0 : i32, i32
  }
  func.func @transform_5(%arg0: i32, %arg1: i32) -> (i32, i32) {
    %c0_i32 = arith.constant 0 : i32
    %c0_i32_0 = arith.constant 0 : i32
    %c0_i32_1 = arith.constant 0 : i32
    return %c0_i32, %c0_i32_0 : i32, i32
  }
  func.func @transform_6(%arg0: i32, %arg1: i32) -> (i32, i32, i32) {
    %c0_i32 = arith.constant 0 : i32
    %c0_i32_0 = arith.constant 0 : i32
    return %arg0, %c0_i32, %arg1 : i32, i32, i32
  }
}

</mosaic_0001>

<llo_original>
// kernel: tpu_custom_call.1
$region0: #{tpu_custom_call.1}
  #allocation0 [shape = 'u32[]', space=smem, size = 0x4, offset = 0x4, fixed_abs, tag = 'smem constant byte address 0x4 - core index']
  #allocation1 [shape = 'u32[72,128]{1,0:T(1,128)}', space=vmem, size = 0x9000, scoped, tag = 'internal scratch']
  %s0 = inlined_call_operand.hbm [shape: f32[2,48,512], index: 0, kind: input, shape index: {}]
  %s1 = inlined_call_operand.vmem [shape: f32[64,48], index: 1, kind: input, shape index: {}]
  %s2 = inlined_call_operand.vmem [shape: f32[64,1], index: 2, kind: input, shape index: {}]
  %s3 = inlined_call_operand.vmem [shape: f32[64,64], index: 3, kind: input, shape index: {}]
  %s4 = inlined_call_operand.vmem [shape: f32[64,1], index: 4, kind: input, shape index: {}]
  %s5 = inlined_call_operand.vmem [shape: f32[16,64], index: 5, kind: input, shape index: {}]
  %s6 = inlined_call_operand.hbm [shape: f32[2,16,512], index: 6, kind: output, shape index: {}]
  %s7 = sld [smem:[#allocation0]]
  $region38: #{tpu_custom_call.1} parent=0
    _
  %s9 = ssub.s32 1, %s7
  %s10 = scalar_select 0, %s9, %s7
  $region1: #{tpu_custom_call.1} parent=0
    #allocation2 [shape = 'u8[196608]{0}', space=vmem, size = 0x30000, scoped, tag = 'input window, operand 0, single buffered']
    #allocation3 [shape = 's32[1]{0}', space=sflag, size = 0x4, scoped, tag = 'scoped memory for tpu_custom_call.1']
    #allocation4 [shape = 's32[1]{0}', space=sflag, size = 0x4, scoped, tag = 'scoped memory for tpu_custom_call.1']
    #allocation5 [shape = 'u8[65536]{0}', space=vmem, size = 0x10000, scoped, tag = 'output window, operand 0, single buffered']
    %11 = vsyncpa [#allocation3], 0
    %12 = vsyncpa [#allocation4], 0
    // Predicated region
    $region2: #{tpu_custom_call.1} parent=1 // pred_check
      _
    $region3: #{tpu_custom_call.1} parent=1 // pred_check_branch
      %14 = sbr.rel (0) target = $region5
    $region4: #{tpu_custom_call.1} parent=1 // pred_region
      %16 = vsyncadd [#allocation3], 0
      %s17 = sshll.u32 %s0, 4
      %s18 = int_to_ptr.hbm [resolvable:$true] %s17
      %s19 = sshll.u32 [#allocation2], 4
      %s20 = int_to_ptr.vmem [resolvable:$true] %s19
      %25 = dma.hbm_to_vmem [thread:$0]  %s18, 6144, %s20, [#allocation3], 512, 512, 32
    $region5: #{tpu_custom_call.1} parent=1 // pred_fallthru
      _
    // Predicated region
    $region6: #{tpu_custom_call.1} parent=1 // pred_check
      _
    $region7: #{tpu_custom_call.1} parent=1 // pred_check_branch
      %27 = sbr.rel (0) target = $region9
    $region8: #{tpu_custom_call.1} parent=1 // pred_region
      _
    $region9: #{tpu_custom_call.1} parent=1 // pred_fallthru
      _
    // Predicated region
    $region10: #{tpu_custom_call.1} parent=1 // pred_check
      _
    $region11: #{tpu_custom_call.1} parent=1 // pred_check_branch
      %29 = sbr.rel (0) target = $region13
    $region12: #{tpu_custom_call.1} parent=1 // pred_region
      _
    $region13: #{tpu_custom_call.1} parent=1 // pred_fallthru
      _
    // Predicated region
    $region14: #{tpu_custom_call.1} parent=1 // pred_check
      _
    $region15: #{tpu_custom_call.1} parent=1 // pred_check_branch
      %31 = sbr.rel (0) target = $region17
    $region16: #{tpu_custom_call.1} parent=1 // pred_region
      _
    $region17: #{tpu_custom_call.1} parent=1 // pred_fallthru
      _
    // Predicated region
    $region18: #{tpu_custom_call.1} parent=1 // pred_check
      _
    $region19: #{tpu_custom_call.1} parent=1 // pred_check_branch
      %33 = sbr.rel (0) target = $region21
    $region20: #{tpu_custom_call.1} parent=1 // pred_region
      _
    $region21: #{tpu_custom_call.1} parent=1 // pred_fallthru
      _
    // Predicated region
    $region22: #{tpu_custom_call.1} parent=1 // pred_check
      _
    $region23: #{tpu_custom_call.1} parent=1 // pred_check_branch
      %35 = sbr.rel (0) target = $region25
    $region24: #{tpu_custom_call.1} parent=1 // pred_region
      _
    $region25: #{tpu_custom_call.1} parent=1 // pred_fallthru
      _
    // Predicated region
    $region26: #{tpu_custom_call.1} parent=1 // pred_check
      _
    $region27: #{tpu_custom_call.1} parent=1 // pred_check_branch
      %37 = sbr.rel (0) target = $region29
    $region28: #{tpu_custom_call.1} parent=1 // pred_region
      %39 = dma.done [#allocation3], 6144
    $region29: #{tpu_custom_call.1} parent=1 // pred_fallthru
      _
    %v40 = vld [vmem:[%s1] sm:$0xff]
    %v41 = vld [vmem:[%s1 + $0x8] sm:$0xff]
    %v42 = vld [vmem:[%s1 + $0x10] sm:$0xff]
    %v43 = vld [vmem:[%s1 + $0x18] sm:$0xff]
    %v44 = vld [vmem:[%s1 + $0x20] sm:$0xff]
    %v45 = vld [vmem:[%s1 + $0x28] sm:$0xff]
    %v46 = vld [vmem:[%s1 + $0x30] sm:$0xff]
    %v47 = vld [vmem:[%s1 + $0x38] sm:$0xff]
    %v48 = vld [vmem:[%s2] sm:$0xff]
    %v49 = vld [vmem:[%s2 + $0x8] sm:$0xff]
    %v50 = vld [vmem:[%s2 + $0x10] sm:$0xff]
    %v51 = vld [vmem:[%s2 + $0x18] sm:$0xff]
    %v52 = vld [vmem:[%s2 + $0x20] sm:$0xff]
    %v53 = vld [vmem:[%s2 + $0x28] sm:$0xff]
    %v54 = vld [vmem:[%s2 + $0x30] sm:$0xff]
    %v55 = vld [vmem:[%s2 + $0x38] sm:$0xff]
    %v56 = vld [vmem:[%s3] sm:$0xff]
    %v57 = vld [vmem:[%s3 + $0x8] sm:$0xff]
    %v58 = vld [vmem:[%s3 + $0x10] sm:$0xff]
    %v59 = vld [vmem:[%s3 + $0x18] sm:$0xff]
    %v60 = vld [vmem:[%s3 + $0x20] sm:$0xff]
    %v61 = vld [vmem:[%s3 + $0x28] sm:$0xff]
    %v62 = vld [vmem:[%s3 + $0x30] sm:$0xff]
    %v63 = vld [vmem:[%s3 + $0x38] sm:$0xff]
    %v64 = vld [vmem:[%s4] sm:$0xff]
    %v65 = vld [vmem:[%s4 + $0x8] sm:$0xff]
    %v66 = vld [vmem:[%s4 + $0x10] sm:$0xff]
    %v67 = vld [vmem:[%s4 + $0x18] sm:$0xff]
    %v68 = vld [vmem:[%s4 + $0x20] sm:$0xff]
    %v69 = vld [vmem:[%s4 + $0x28] sm:$0xff]
    %v70 = vld [vmem:[%s4 + $0x30] sm:$0xff]
    %v71 = vld [vmem:[%s4 + $0x38] sm:$0xff]
    %v72 = vld [vmem:[%s5] sm:$0xff]
    %v73 = vld [vmem:[%s5 + $0x8] sm:$0xff]
    %v74 = vld [vmem:[#allocation2] sm:$0xff]
    %v75 = vld [vmem:[#allocation2 + $0x8] sm:$0xff]
    %v76 = vld [vmem:[#allocation2 + $0x10] sm:$0xff]
    %v77 = vld [vmem:[#allocation2 + $0x18] sm:$0xff]
    %v78 = vld [vmem:[#allocation2 + $0x20] sm:$0xff]
    %v79 = vld [vmem:[#allocation2 + $0x28] sm:$0xff]
    %v80 = vld [vmem:[#allocation2 + $0x30] sm:$0xff]
    %v81 = vld [vmem:[#allocation2 + $0x38] sm:$0xff]
    %v82 = vld [vmem:[#allocation2 + $0x40] sm:$0xff]
    %v83 = vld [vmem:[#allocation2 + $0x48] sm:$0xff]
    %v84 = vld [vmem:[#allocation2 + $0x50] sm:$0xff]
    %v85 = vld [vmem:[#allocation2 + $0x58] sm:$0xff]
    %v86 = vld [vmem:[#allocation2 + $0x60] sm:$0xff]
    %v87 = vld [vmem:[#allocation2 + $0x68] sm:$0xff]
    %v88 = vld [vmem:[#allocation2 + $0x70] sm:$0xff]
    %v89 = vld [vmem:[#allocation2 + $0x78] sm:$0xff]
    %v90 = vld [vmem:[#allocation2 + $0x80] sm:$0xff]
    %v91 = vld [vmem:[#allocation2 + $0x88] sm:$0xff]
    %v92 = vld [vmem:[#allocation2 + $0x90] sm:$0xff]
    %v93 = vld [vmem:[#allocation2 + $0x98] sm:$0xff]
    %v94 = vld [vmem:[#allocation2 + $0xa0] sm:$0xff]
    %v95 = vld [vmem:[#allocation2 + $0xa8] sm:$0xff]
    %v96 = vld [vmem:[#allocation2 + $0xb0] sm:$0xff]
    %v97 = vld [vmem:[#allocation2 + $0xb8] sm:$0xff]
    %99 = vset.pattern.permute.xlu0 0
    %100 = vperm.xlu0 %99, %v48
    %v101 = vpop.permute.xlu0 %100
    %104 = vset.pattern.permute.xlu0 0
    %105 = vperm.xlu0 %104, %v49
    %v106 = vpop.permute.xlu0 %105
    %109 = vset.pattern.permute.xlu0 0
    %110 = vperm.xlu0 %109, %v50
    %v111 = vpop.permute.xlu0 %110
    %114 = vset.pattern.permute.xlu0 0
    %115 = vperm.xlu0 %114, %v51
    %v116 = vpop.permute.xlu0 %115
    %119 = vset.pattern.permute.xlu0 0
    %120 = vperm.xlu0 %119, %v52
    %v121 = vpop.permute.xlu0 %120
    %124 = vset.pattern.permute.xlu0 0
    %125 = vperm.xlu0 %124, %v53
    %v126 = vpop.permute.xlu0 %125
    %129 = vset.pattern.permute.xlu0 0
    %130 = vperm.xlu0 %129, %v54
    %v131 = vpop.permute.xlu0 %130
    %134 = vset.pattern.permute.xlu0 0
    %135 = vperm.xlu0 %134, %v55
    %v136 = vpop.permute.xlu0 %135
    %vm138 = vcmask 392192
    %v140 = vsel %vm138, %v40, 0
    %v143 = vsel %vm138, %v41, 0
    %v146 = vsel %vm138, %v42, 0
    %v149 = vsel %vm138, %v43, 0
    %v152 = vsel %vm138, %v44, 0
    %v155 = vsel %vm138, %v45, 0
    %v158 = vsel %vm138, %v46, 0
    %v161 = vsel %vm138, %v47, 0
    %163 = vmatpush.msra.mxu0 0.0
    %164 = vmatpush.msra.mxu0 0.0
    %165 = vmatpush.msra.mxu0 0.0
    %166 = vmatpush.msra.mxu0 0.0
    %167 = vmatpush.msra.mxu0 0.0
    %168 = vmatpush.msra.mxu0 0.0
    %169 = vmatpush.msra.mxu0 0.0
    %170 = vmatpush.msra.mxu0 0.0
    %171 = vmatpush.msra.mxu0 0.0
    %172 = vmatpush.msra.mxu0 0.0
    %173 = vmatpush.msra.mxu0 %v94
    %174 = vmatpush.msra.mxu0 %v90
    %175 = vmatpush.msra.mxu0 %v86
    %176 = vmatpush.msra.mxu0 %v82
    %177 = vmatpush.msra.mxu0 %v78
    %178 = vmatpush.msra.mxu0 %v74
    %179 = vmatmul.f32.gmra.mxu0 %v140
    %v180 = vpop.f32.mrf.mxu0
    %v181 = vadd.f32 %v101, %v180
    %182 = vmatmul.f32.gmra.mxu0 %v143
    %v183 = vpop.f32.mrf.mxu0
    %v184 = vadd.f32 %v106, %v183
    %185 = vmatmul.f32.gmra.mxu0 %v146
    %v186 = vpop.f32.mrf.mxu0
    %v187 = vadd.f32 %v111, %v186
    %188 = vmatmul.f32.gmra.mxu0 %v149
    %v189 = vpop.f32.mrf.mxu0
    %v190 = vadd.f32 %v116, %v189
    %191 = vmatmul.f32.gmra.mxu0 %v152
    %v192 = vpop.f32.mrf.mxu0
    %v193 = vadd.f32 %v121, %v192
    %194 = vmatmul.f32.gmra.mxu0 %v155
    %v195 = vpop.f32.mrf.mxu0
    %v196 = vadd.f32 %v126, %v195
    %197 = vmatmul.f32.gmra.mxu0 %v158
    %v198 = vpop.f32.mrf.mxu0
    %v199 = vadd.f32 %v131, %v198
    %200 = vmatmul.f32.gmra.mxu0 %v161
    %v201 = vpop.f32.mrf.mxu0
    %v202 = vadd.f32 %v136, %v201
    %203 = vdwg.mxu0
    %204 = vmatpush.msra.mxu0 0.0
    %205 = vmatpush.msra.mxu0 0.0
    %206 = vmatpush.msra.mxu0 0.0
    %207 = vmatpush.msra.mxu0 0.0
    %208 = vmatpush.msra.mxu0 0.0
    %209 = vmatpush.msra.mxu0 0.0
    %210 = vmatpush.msra.mxu0 0.0
    %211 = vmatpush.msra.mxu0 0.0
    %212 = vmatpush.msra.mxu0 0.0
    %213 = vmatpush.msra.mxu0 0.0
    %214 = vmatpush.msra.mxu0 %v95
    %215 = vmatpush.msra.mxu0 %v91
    %216 = vmatpush.msra.mxu0 %v87
    %217 = vmatpush.msra.mxu0 %v83
    %218 = vmatpush.msra.mxu0 %v79
    %219 = vmatpush.msra.mxu0 %v75
    %220 = vmatmul.f32.gmra.mxu0 %v140
    %v221 = vpop.f32.mrf.mxu0
    %v222 = vadd.f32 %v101, %v221
    %223 = vmatmul.f32.gmra.mxu0 %v143
    %v224 = vpop.f32.mrf.mxu0
    %v225 = vadd.f32 %v106, %v224
    %226 = vmatmul.f32.gmra.mxu0 %v146
    %v227 = vpop.f32.mrf.mxu0
    %v228 = vadd.f32 %v111, %v227
    %229 = vmatmul.f32.gmra.mxu0 %v149
    %v230 = vpop.f32.mrf.mxu0
    %v231 = vadd.f32 %v116, %v230
    %232 = vmatmul.f32.gmra.mxu0 %v152
    %v233 = vpop.f32.mrf.mxu0
    %v234 = vadd.f32 %v121, %v233
    %235 = vmatmul.f32.gmra.mxu0 %v155
    %v236 = vpop.f32.mrf.mxu0
    %v237 = vadd.f32 %v126, %v236
    %238 = vmatmul.f32.gmra.mxu0 %v158
    %v239 = vpop.f32.mrf.mxu0
    %v240 = vadd.f32 %v131, %v239
    %241 = vmatmul.f32.gmra.mxu0 %v161
    %v242 = vpop.f32.mrf.mxu0
    %v243 = vadd.f32 %v136, %v242
    %244 = vdwg.mxu0
    %245 = vmatpush.msra.mxu0 0.0
    %246 = vmatpush.msra.mxu0 0.0
    %247 = vmatpush.msra.mxu0 0.0
    %248 = vmatpush.msra.mxu0 0.0
    %249 = vmatpush.msra.mxu0 0.0
    %250 = vmatpush.msra.mxu0 0.0
    %251 = vmatpush.msra.mxu0 0.0
    %252 = vmatpush.msra.mxu0 0.0
    %253 = vmatpush.msra.mxu0 0.0
    %254 = vmatpush.msra.mxu0 0.0
    %255 = vmatpush.msra.mxu0 %v96
    %256 = vmatpush.msra.mxu0 %v92
    %257 = vmatpush.msra.mxu0 %v88
    %258 = vmatpush.msra.mxu0 %v84
    %259 = vmatpush.msra.mxu0 %v80
    %260 = vmatpush.msra.mxu0 %v76
    %261 = vmatmul.f32.gmra.mxu0 %v140
    %v262 = vpop.f32.mrf.mxu0
    %v263 = vadd.f32 %v101, %v262
    %264 = vmatmul.f32.gmra.mxu0 %v143
    %v265 = vpop.f32.mrf.mxu0
    %v266 = vadd.f32 %v106, %v265
    %267 = vmatmul.f32.gmra.mxu0 %v146
    %v268 = vpop.f32.mrf.mxu0
    %v269 = vadd.f32 %v111, %v268
    %270 = vmatmul.f32.gmra.mxu0 %v149
    %v271 = vpop.f32.mrf.mxu0
    %v272 = vadd.f32 %v116, %v271
    %273 = vmatmul.f32.gmra.mxu0 %v152
    %v274 = vpop.f32.mrf.mxu0
    %v275 = vadd.f32 %v121, %v274
    %276 = vmatmul.f32.gmra.mxu0 %v155
    %v277 = vpop.f32.mrf.mxu0
    %v278 = vadd.f32 %v126, %v277
    %279 = vmatmul.f32.gmra.mxu0 %v158
    %v280 = vpop.f32.mrf.mxu0
    %v281 = vadd.f32 %v131, %v280
    %282 = vmatmul.f32.gmra.mxu0 %v161
    %v283 = vpop.f32.mrf.mxu0
    %v284 = vadd.f32 %v136, %v283
    %285 = vdwg.mxu0
    %286 = vmatpush.msra.mxu0 0.0
    %287 = vmatpush.msra.mxu0 0.0
    %288 = vmatpush.msra.mxu0 0.0
    %289 = vmatpush.msra.mxu0 0.0
    %290 = vmatpush.msra.mxu0 0.0
    %291 = vmatpush.msra.mxu0 0.0
    %292 = vmatpush.msra.mxu0 0.0
    %293 = vmatpush.msra.mxu0 0.0
    %294 = vmatpush.msra.mxu0 0.0
    %295 = vmatpush.msra.mxu0 0.0
    %296 = vmatpush.msra.mxu0 %v97
    %297 = vmatpush.msra.mxu0 %v93
    %298 = vmatpush.msra.mxu0 %v89
    %299 = vmatpush.msra.mxu0 %v85
    %300 = vmatpush.msra.mxu0 %v81
    %301 = vmatpush.msra.mxu0 %v77
    %302 = vmatmul.f32.gmra.mxu0 %v140
    %v303 = vpop.f32.mrf.mxu0
    %v304 = vadd.f32 %v101, %v303
    %305 = vmatmul.f32.gmra.mxu0 %v143
    %v306 = vpop.f32.mrf.mxu0
    %v307 = vadd.f32 %v106, %v306
    %308 = vmatmul.f32.gmra.mxu0 %v146
    %v309 = vpop.f32.mrf.mxu0
    %v310 = vadd.f32 %v111, %v309
    %311 = vmatmul.f32.gmra.mxu0 %v149
    %v312 = vpop.f32.mrf.mxu0
    %v313 = vadd.f32 %v116, %v312
    %314 = vmatmul.f32.gmra.mxu0 %v152
    %v315 = vpop.f32.mrf.mxu0
    %v316 = vadd.f32 %v121, %v315
    %317 = vmatmul.f32.gmra.mxu0 %v155
    %v318 = vpop.f32.mrf.mxu0
    %v319 = vadd.f32 %v126, %v318
    %320 = vmatmul.f32.gmra.mxu0 %v158
    %v321 = vpop.f32.mrf.mxu0
    %v322 = vadd.f32 %v131, %v321
    %323 = vmatmul.f32.gmra.mxu0 %v161
    %v324 = vpop.f32.mrf.mxu0
    %v325 = vadd.f32 %v136, %v324
    %326 = vdwg.mxu0
    %v327 = vmax.f32 %v181, 0.0
    %v328 = vmax.f32 %v222, 0.0
    %v329 = vmax.f32 %v263, 0.0
    %v330 = vmax.f32 %v304, 0.0
    %v331 = vmax.f32 %v184, 0.0
    %v332 = vmax.f32 %v225, 0.0
    %v333 = vmax.f32 %v266, 0.0
    %v334 = vmax.f32 %v307, 0.0
    %v335 = vmax.f32 %v187, 0.0
    %v336 = vmax.f32 %v228, 0.0
    %v337 = vmax.f32 %v269, 0.0
    %v338 = vmax.f32 %v310, 0.0
    %v339 = vmax.f32 %v190, 0.0
    %v340 = vmax.f32 %v231, 0.0
    %v341 = vmax.f32 %v272, 0.0
    %v342 = vmax.f32 %v313, 0.0
    %v343 = vmax.f32 %v193, 0.0
    %v344 = vmax.f32 %v234, 0.0
    %v345 = vmax.f32 %v275, 0.0
    %v346 = vmax.f32 %v316, 0.0
    %v347 = vmax.f32 %v196, 0.0
    %v348 = vmax.f32 %v237, 0.0
    %v349 = vmax.f32 %v278, 0.0
    %v350 = vmax.f32 %v319, 0.0
    %v351 = vmax.f32 %v199, 0.0
    %v352 = vmax.f32 %v240, 0.0
    %v353 = vmax.f32 %v281, 0.0
    %v354 = vmax.f32 %v322, 0.0
    %v355 = vmax.f32 %v202, 0.0
    %v356 = vmax.f32 %v243, 0.0
    %v357 = vmax.f32 %v284, 0.0
    %v358 = vmax.f32 %v325, 0.0
    %360 = vset.pattern.permute.xlu0 0
    %361 = vperm.xlu0 %360, %v64
    %v362 = vpop.permute.xlu0 %361
    %365 = vset.pattern.permute.xlu0 0
    %366 = vperm.xlu0 %365, %v65
    %v367 = vpop.permute.xlu0 %366
    %370 = vset.pattern.permute.xlu0 0
    %371 = vperm.xlu0 %370, %v66
    %v372 = vpop.permute.xlu0 %371
    %375 = vset.pattern.permute.xlu0 0
    %376 = vperm.xlu0 %375, %v67
    %v377 = vpop.permute.xlu0 %376
    %380 = vset.pattern.permute.xlu0 0
    %381 = vperm.xlu0 %380, %v68
    %v382 = vpop.permute.xlu0 %381
    %385 = vset.pattern.permute.xlu0 0
    %386 = vperm.xlu0 %385, %v69
    %v387 = vpop.permute.xlu0 %386
    %390 = vset.pattern.permute.xlu0 0
    %391 = vperm.xlu0 %390, %v70
    %v392 = vpop.permute.xlu0 %391
    %395 = vset.pattern.permute.xlu0 0
    %396 = vperm.xlu0 %395, %v71
    %v397 = vpop.permute.xlu0 %396
    %vm399 = vcmask 523264
    %v401 = vsel %vm399, %v56, 0
    %v404 = vsel %vm399, %v57, 0
    %v407 = vsel %vm399, %v58, 0
    %v410 = vsel %vm399, %v59, 0
    %v413 = vsel %vm399, %v60, 0
    %v416 = vsel %vm399, %v61, 0
    %v419 = vsel %vm399, %v62, 0
    %v422 = vsel %vm399, %v63, 0
    %424 = vmatpush.msra.mxu0 0.0
    %425 = vmatpush.msra.mxu0 0.0
    %426 = vmatpush.msra.mxu0 0.0
    %427 = vmatpush.msra.mxu0 0.0
    %428 = vmatpush.msra.mxu0 0.0
    %429 = vmatpush.msra.mxu0 0.0
    %430 = vmatpush.msra.mxu0 0.0
    %431 = vmatpush.msra.mxu0 0.0
    %432 = vmatpush.msra.mxu0 %v355
    %433 = vmatpush.msra.mxu0 %v351
    %434 = vmatpush.msra.mxu0 %v347
    %435 = vmatpush.msra.mxu0 %v343
    %436 = vmatpush.msra.mxu0 %v339
    %437 = vmatpush.msra.mxu0 %v335
    %438 = vmatpush.msra.mxu0 %v331
    %439 = vmatpush.msra.mxu0 %v327
    %440 = vmatmul.f32.gmra.mxu0 %v401
    %v441 = vpop.f32.mrf.mxu0
    %v442 = vadd.f32 %v362, %v441
    %443 = vmatmul.f32.gmra.mxu0 %v404
    %v444 = vpop.f32.mrf.mxu0
    %v445 = vadd.f32 %v367, %v444
    %446 = vmatmul.f32.gmra.mxu0 %v407
    %v447 = vpop.f32.mrf.mxu0
    %v448 = vadd.f32 %v372, %v447
    %449 = vmatmul.f32.gmra.mxu0 %v410
    %v450 = vpop.f32.mrf.mxu0
    %v451 = vadd.f32 %v377, %v450
    %452 = vmatmul.f32.gmra.mxu0 %v413
    %v453 = vpop.f32.mrf.mxu0
    %v454 = vadd.f32 %v382, %v453
    %455 = vmatmul.f32.gmra.mxu0 %v416
    %v456 = vpop.f32.mrf.mxu0
    %v457 = vadd.f32 %v387, %v456
    %458 = vmatmul.f32.gmra.mxu0 %v419
    %v459 = vpop.f32.mrf.mxu0
    %v460 = vadd.f32 %v392, %v459
    %461 = vmatmul.f32.gmra.mxu0 %v422
    %v462 = vpop.f32.mrf.mxu0
    %v463 = vadd.f32 %v397, %v462
    %464 = vdwg.mxu0
    %465 = vmatpush.msra.mxu0 0.0
    %466 = vmatpush.msra.mxu0 0.0
    %467 = vmatpush.msra.mxu0 0.0
    %468 = vmatpush.msra.mxu0 0.0
    %469 = vmatpush.msra.mxu0 0.0
    %470 = vmatpush.msra.mxu0 0.0
    %471 = vmatpush.msra.mxu0 0.0
    %472 = vmatpush.msra.mxu0 0.0
    %473 = vmatpush.msra.mxu0 %v356
    %474 = vmatpush.msra.mxu0 %v352
    %475 = vmatpush.msra.mxu0 %v348
    %476 = vmatpush.msra.mxu0 %v344
    %477 = vmatpush.msra.mxu0 %v340
    %478 = vmatpush.msra.mxu0 %v336
    %479 = vmatpush.msra.mxu0 %v332
    %480 = vmatpush.msra.mxu0 %v328
    %481 = vmatmul.f32.gmra.mxu0 %v401
    %v482 = vpop.f32.mrf.mxu0
    %v483 = vadd.f32 %v362, %v482
    %484 = vmatmul.f32.gmra.mxu0 %v404
    %v485 = vpop.f32.mrf.mxu0
    %v486 = vadd.f32 %v367, %v485
    %487 = vmatmul.f32.gmra.mxu0 %v407
    %v488 = vpop.f32.mrf.mxu0
    %v489 = vadd.f32 %v372, %v488
    %490 = vmatmul.f32.gmra.mxu0 %v410
    %v491 = vpop.f32.mrf.mxu0
    %v492 = vadd.f32 %v377, %v491
    %493 = vmatmul.f32.gmra.mxu0 %v413
    %v494 = vpop.f32.mrf.mxu0
    %v495 = vadd.f32 %v382, %v494
    %496 = vmatmul.f32.gmra.mxu0 %v416
    %v497 = vpop.f32.mrf.mxu0
    %v498 = vadd.f32 %v387, %v497
    %499 = vmatmul.f32.gmra.mxu0 %v419
    %v500 = vpop.f32.mrf.mxu0
    %v501 = vadd.f32 %v392, %v500
    %502 = vmatmul.f32.gmra.mxu0 %v422
    %v503 = vpop.f32.mrf.mxu0
    %v504 = vadd.f32 %v397, %v503
    %505 = vdwg.mxu0
    %506 = vmatpush.msra.mxu0 0.0
    %507 = vmatpush.msra.mxu0 0.0
    %508 = vmatpush.msra.mxu0 0.0
    %509 = vmatpush.msra.mxu0 0.0
    %510 = vmatpush.msra.mxu0 0.0
    %511 = vmatpush.msra.mxu0 0.0
    %512 = vmatpush.msra.mxu0 0.0
    %513 = vmatpush.msra.mxu0 0.0
    %514 = vmatpush.msra.mxu0 %v357
    %515 = vmatpush.msra.mxu0 %v353
    %516 = vmatpush.msra.mxu0 %v349
    %517 = vmatpush.msra.mxu0 %v345
    %518 = vmatpush.msra.mxu0 %v341
    %519 = vmatpush.msra.mxu0 %v337
    %520 = vmatpush.msra.mxu0 %v333
    %521 = vmatpush.msra.mxu0 %v329
    %522 = vmatmul.f32.gmra.mxu0 %v401
    %v523 = vpop.f32.mrf.mxu0
    %v524 = vadd.f32 %v362, %v523
    %525 = vmatmul.f32.gmra.mxu0 %v404
    %v526 = vpop.f32.mrf.mxu0
    %v527 = vadd.f32 %v367, %v526
    %528 = vmatmul.f32.gmra.mxu0 %v407
    %v529 = vpop.f32.mrf.mxu0
    %v530 = vadd.f32 %v372, %v529
    %531 = vmatmul.f32.gmra.mxu0 %v410
    %v532 = vpop.f32.mrf.mxu0
    %v533 = vadd.f32 %v377, %v532
    %534 = vmatmul.f32.gmra.mxu0 %v413
    %v535 = vpop.f32.mrf.mxu0
    %v536 = vadd.f32 %v382, %v535
    %537 = vmatmul.f32.gmra.mxu0 %v416
    %v538 = vpop.f32.mrf.mxu0
    %v539 = vadd.f32 %v387, %v538
    %540 = vmatmul.f32.gmra.mxu0 %v419
    %v541 = vpop.f32.mrf.mxu0
    %v542 = vadd.f32 %v392, %v541
    %543 = vmatmul.f32.gmra.mxu0 %v422
    %v544 = vpop.f32.mrf.mxu0
    %v545 = vadd.f32 %v397, %v544
    %546 = vdwg.mxu0
    %547 = vmatpush.msra.mxu0 0.0
    %548 = vmatpush.msra.mxu0 0.0
    %549 = vmatpush.msra.mxu0 0.0
    %550 = vmatpush.msra.mxu0 0.0
    %551 = vmatpush.msra.mxu0 0.0
    %552 = vmatpush.msra.mxu0 0.0
    %553 = vmatpush.msra.mxu0 0.0
    %554 = vmatpush.msra.mxu0 0.0
    %555 = vmatpush.msra.mxu0 %v358
    %556 = vmatpush.msra.mxu0 %v354
    %557 = vmatpush.msra.mxu0 %v350
    %558 = vmatpush.msra.mxu0 %v346
    %559 = vmatpush.msra.mxu0 %v342
    %560 = vmatpush.msra.mxu0 %v338
    %561 = vmatpush.msra.mxu0 %v334
    %562 = vmatpush.msra.mxu0 %v330
    %563 = vmatmul.f32.gmra.mxu0 %v401
    %v564 = vpop.f32.mrf.mxu0
    %v565 = vadd.f32 %v362, %v564
    %566 = vmatmul.f32.gmra.mxu0 %v404
    %v567 = vpop.f32.mrf.mxu0
    %v568 = vadd.f32 %v367, %v567
    %569 = vmatmul.f32.gmra.mxu0 %v407
    %v570 = vpop.f32.mrf.mxu0
    %v571 = vadd.f32 %v372, %v570
    %572 = vmatmul.f32.gmra.mxu0 %v410
    %v573 = vpop.f32.mrf.mxu0
    %v574 = vadd.f32 %v377, %v573
    %575 = vmatmul.f32.gmra.mxu0 %v413
    %v576 = vpop.f32.mrf.mxu0
    %v577 = vadd.f32 %v382, %v576
    %578 = vmatmul.f32.gmra.mxu0 %v416
    %v579 = vpop.f32.mrf.mxu0
    %v580 = vadd.f32 %v387, %v579
    %581 = vmatmul.f32.gmra.mxu0 %v419
    %v582 = vpop.f32.mrf.mxu0
    %v583 = vadd.f32 %v392, %v582
    %584 = vmatmul.f32.gmra.mxu0 %v422
    %v585 = vpop.f32.mrf.mxu0
    %v586 = vadd.f32 %v397, %v585
    %587 = vdwg.mxu0
    %v588 = vmax.f32 %v442, 0.0
    %v589 = vmax.f32 %v483, 0.0
    %v590 = vmax.f32 %v524, 0.0
    %v591 = vmax.f32 %v565, 0.0
    %v592 = vmax.f32 %v445, 0.0
    %v593 = vmax.f32 %v486, 0.0
    %v594 = vmax.f32 %v527, 0.0
    %v595 = vmax.f32 %v568, 0.0
    %v596 = vmax.f32 %v448, 0.0
    %v597 = vmax.f32 %v489, 0.0
    %v598 = vmax.f32 %v530, 0.0
    %v599 = vmax.f32 %v571, 0.0
    %v600 = vmax.f32 %v451, 0.0
    %v601 = vmax.f32 %v492, 0.0
    %v602 = vmax.f32 %v533, 0.0
    %v603 = vmax.f32 %v574, 0.0
    %v604 = vmax.f32 %v454, 0.0
    %v605 = vmax.f32 %v495, 0.0
    %v606 = vmax.f32 %v536, 0.0
    %v607 = vmax.f32 %v577, 0.0
    %v608 = vmax.f32 %v457, 0.0
    %v609 = vmax.f32 %v498, 0.0
    %v610 = vmax.f32 %v539, 0.0
    %v611 = vmax.f32 %v580, 0.0
    %v612 = vmax.f32 %v460, 0.0
    %v613 = vmax.f32 %v501, 0.0
    %v614 = vmax.f32 %v542, 0.0
    %v615 = vmax.f32 %v583, 0.0
    %v616 = vmax.f32 %v463, 0.0
    %v617 = vmax.f32 %v504, 0.0
    %v618 = vmax.f32 %v545, 0.0
    %v619 = vmax.f32 %v586, 0.0
    %v621 = vsel %vm399, %v72, 0
    %v624 = vsel %vm399, %v73, 0
    %626 = vmatpush.msra.mxu0 0.0
    %627 = vmatpush.msra.mxu0 0.0
    %628 = vmatpush.msra.mxu0 0.0
    %629 = vmatpush.msra.mxu0 0.0
    %630 = vmatpush.msra.mxu0 0.0
    %631 = vmatpush.msra.mxu0 0.0
    %632 = vmatpush.msra.mxu0 0.0
    %633 = vmatpush.msra.mxu0 0.0
    %634 = vmatpush.msra.mxu0 %v616
    %635 = vmatpush.msra.mxu0 %v612
    %636 = vmatpush.msra.mxu0 %v608
    %637 = vmatpush.msra.mxu0 %v604
    %638 = vmatpush.msra.mxu0 %v600
    %639 = vmatpush.msra.mxu0 %v596
    %640 = vmatpush.msra.mxu0 %v592
    %641 = vmatpush.msra.mxu0 %v588
    %642 = vmatmul.f32.gmra.mxu0 %v621
    %v643 = vpop.f32.mrf.mxu0
    %v644 = vadd.f32 0.0, %v643
    %645 = vmatmul.f32.gmra.mxu0 %v624
    %v646 = vpop.f32.mrf.mxu0
    %v647 = vadd.f32 0.0, %v646
    %648 = vdwg.mxu0
    %649 = vmatpush.msra.mxu0 0.0
    %650 = vmatpush.msra.mxu0 0.0
    %651 = vmatpush.msra.mxu0 0.0
    %652 = vmatpush.msra.mxu0 0.0
    %653 = vmatpush.msra.mxu0 0.0
    %654 = vmatpush.msra.mxu0 0.0
    %655 = vmatpush.msra.mxu0 0.0
    %656 = vmatpush.msra.mxu0 0.0
    %657 = vmatpush.msra.mxu0 %v617
    %658 = vmatpush.msra.mxu0 %v613
    %659 = vmatpush.msra.mxu0 %v609
    %660 = vmatpush.msra.mxu0 %v605
    %661 = vmatpush.msra.mxu0 %v601
    %662 = vmatpush.msra.mxu0 %v597
    %663 = vmatpush.msra.mxu0 %v593
    %664 = vmatpush.msra.mxu0 %v589
    %665 = vmatmul.f32.gmra.mxu0 %v621
    %v666 = vpop.f32.mrf.mxu0
    %v667 = vadd.f32 0.0, %v666
    %668 = vmatmul.f32.gmra.mxu0 %v624
    %v669 = vpop.f32.mrf.mxu0
    %v670 = vadd.f32 0.0, %v669
    %671 = vdwg.mxu0
    %672 = vmatpush.msra.mxu0 0.0
    %673 = vmatpush.msra.mxu0 0.0
    %674 = vmatpush.msra.mxu0 0.0
    %675 = vmatpush.msra.mxu0 0.0
    %676 = vmatpush.msra.mxu0 0.0
    %677 = vmatpush.msra.mxu0 0.0
    %678 = vmatpush.msra.mxu0 0.0
    %679 = vmatpush.msra.mxu0 0.0
    %680 = vmatpush.msra.mxu0 %v618
    %681 = vmatpush.msra.mxu0 %v614
    %682 = vmatpush.msra.mxu0 %v610
    %683 = vmatpush.msra.mxu0 %v606
    %684 = vmatpush.msra.mxu0 %v602
    %685 = vmatpush.msra.mxu0 %v598
    %686 = vmatpush.msra.mxu0 %v594
    %687 = vmatpush.msra.mxu0 %v590
    %688 = vmatmul.f32.gmra.mxu0 %v621
    %v689 = vpop.f32.mrf.mxu0
    %v690 = vadd.f32 0.0, %v689
    %691 = vmatmul.f32.gmra.mxu0 %v624
    %v692 = vpop.f32.mrf.mxu0
    %v693 = vadd.f32 0.0, %v692
    %694 = vdwg.mxu0
    %695 = vmatpush.msra.mxu0 0.0
    %696 = vmatpush.msra.mxu0 0.0
    %697 = vmatpush.msra.mxu0 0.0
    %698 = vmatpush.msra.mxu0 0.0
    %699 = vmatpush.msra.mxu0 0.0
    %700 = vmatpush.msra.mxu0 0.0
    %701 = vmatpush.msra.mxu0 0.0
    %702 = vmatpush.msra.mxu0 0.0
    %703 = vmatpush.msra.mxu0 %v619
    %704 = vmatpush.msra.mxu0 %v615
    %705 = vmatpush.msra.mxu0 %v611
    %706 = vmatpush.msra.mxu0 %v607
    %707 = vmatpush.msra.mxu0 %v603
    %708 = vmatpush.msra.mxu0 %v599
    %709 = vmatpush.msra.mxu0 %v595
    %710 = vmatpush.msra.mxu0 %v591
    %711 = vmatmul.f32.gmra.mxu0 %v621
    %v712 = vpop.f32.mrf.mxu0
    %v713 = vadd.f32 0.0, %v712
    %714 = vmatmul.f32.gmra.mxu0 %v624
    %v715 = vpop.f32.mrf.mxu0
    %v716 = vadd.f32 0.0, %v715
    %717 = vdwg.mxu0
    %718 = vst [vmem:[#allocation5] sm:$0xff] %v644
    %719 = vst [vmem:[#allocation5 + $0x8] sm:$0xff] %v667
    %720 = vst [vmem:[#allocation5 + $0x10] sm:$0xff] %v690
    %721 = vst [vmem:[#allocation5 + $0x18] sm:$0xff] %v713
    %722 = vst [vmem:[#allocation5 + $0x20] sm:$0xff] %v647
    %723 = vst [vmem:[#allocation5 + $0x28] sm:$0xff] %v670
    %724 = vst [vmem:[#allocation5 + $0x30] sm:$0xff] %v693
    %725 = vst [vmem:[#allocation5 + $0x38] sm:$0xff] %v716
    %s726 = scalar_lea.vmem [#allocation2], 192
    %v727 = vld [vmem:[%s726] sm:$0xff]
    %v728 = vld [vmem:[%s726 + $0x8] sm:$0xff]
    %v729 = vld [vmem:[%s726 + $0x10] sm:$0xff]
    %v730 = vld [vmem:[%s726 + $0x18] sm:$0xff]
    %v731 = vld [vmem:[%s726 + $0x20] sm:$0xff]
    %v732 = vld [vmem:[%s726 + $0x28] sm:$0xff]
    %v733 = vld [vmem:[%s726 + $0x30] sm:$0xff]
    %v734 = vld [vmem:[%s726 + $0x38] sm:$0xff]
    %v735 = vld [vmem:[%s726 + $0x40] sm:$0xff]
    %v736 = vld [vmem:[%s726 + $0x48] sm:$0xff]
    %v737 = vld [vmem:[%s726 + $0x50] sm:$0xff]
    %v738 = vld [vmem:[%s726 + $0x58] sm:$0xff]
    %v739 = vld [vmem:[%s726 + $0x60] sm:$0xff]
    %v740 = vld [vmem:[%s726 + $0x68] sm:$0xff]
    %v741 = vld [vmem:[%s726 + $0x70] sm:$0xff]
    %v742 = vld [vmem:[%s726 + $0x78] sm:$0xff]
    %v743 = vld [vmem:[%s726 + $0x80] sm:$0xff]
    %v744 = vld [vmem:[%s726 + $0x88] sm:$0xff]
    %v745 = vld [vmem:[%s726 + $0x90] sm:$0xff]
    %v746 = vld [vmem:[%s726 + $0x98] sm:$0xff]
    %v747 = vld [vmem:[%s726 + $0xa0] sm:$0xff]
    %v748 = vld [vmem:[%s726 + $0xa8] sm:$0xff]
    %v749 = vld [vmem:[%s726 + $0xb0] sm:$0xff]
    %v750 = vld [vmem:[%s726 + $0xb8] sm:$0xff]
    %751 = vmatpush.msra.mxu0 0.0
    %752 = vmatpush.msra.mxu0 0.0
    %753 = vmatpush.msra.mxu0 0.0
    %754 = vmatpush.msra.mxu0 0.0
    %755 = vmatpush.msra.mxu0 0.0
    %756 = vmatpush.msra.mxu0 0.0
    %757 = vmatpush.msra.mxu0 0.0
    %758 = vmatpush.msra.mxu0 0.0
    %759 = vmatpush.msra.mxu0 0.0
    %760 = vmatpush.msra.mxu0 0.0
    %761 = vmatpush.msra.mxu0 %v747
    %762 = vmatpush.msra.mxu0 %v743
    %763 = vmatpush.msra.mxu0 %v739
    %764 = vmatpush.msra.mxu0 %v735
    %765 = vmatpush.msra.mxu0 %v731
    %766 = vmatpush.msra.mxu0 %v727
    %767 = vmatmul.f32.gmra.mxu0 %v140
    %v768 = vpop.f32.mrf.mxu0
    %v769 = vadd.f32 %v101, %v768
    %770 = vmatmul.f32.gmra.mxu0 %v143
    %v771 = vpop.f32.mrf.mxu0
    %v772 = vadd.f32 %v106, %v771
    %773 = vmatmul.f32.gmra.mxu0 %v146
    %v774 = vpop.f32.mrf.mxu0
    %v775 = vadd.f32 %v111, %v774
    %776 = vmatmul.f32.gmra.mxu0 %v149
    %v777 = vpop.f32.mrf.mxu0
    %v778 = vadd.f32 %v116, %v777
    %779 = vmatmul.f32.gmra.mxu0 %v152
    %v780 = vpop.f32.mrf.mxu0
    %v781 = vadd.f32 %v121, %v780
    %782 = vmatmul.f32.gmra.mxu0 %v155
    %v783 = vpop.f32.mrf.mxu0
    %v784 = vadd.f32 %v126, %v783
    %785 = vmatmul.f32.gmra.mxu0 %v158
    %v786 = vpop.f32.mrf.mxu0
    %v787 = vadd.f32 %v131, %v786
    %788 = vmatmul.f32.gmra.mxu0 %v161
    %v789 = vpop.f32.mrf.mxu0
    %v790 = vadd.f32 %v136, %v789
    %791 = vdwg.mxu0
    %792 = vmatpush.msra.mxu0 0.0
    %793 = vmatpush.msra.mxu0 0.0
    %794 = vmatpush.msra.mxu0 0.0
    %795 = vmatpush.msra.mxu0 0.0
    %796 = vmatpush.msra.mxu0 0.0
    %797 = vmatpush.msra.mxu0 0.0
    %798 = vmatpush.msra.mxu0 0.0
    %799 = vmatpush.msra.mxu0 0.0
    %800 = vmatpush.msra.mxu0 0.0
    %801 = vmatpush.msra.mxu0 0.0
    %802 = vmatpush.msra.mxu0 %v748
    %803 = vmatpush.msra.mxu0 %v744
    %804 = vmatpush.msra.mxu0 %v740
    %805 = vmatpush.msra.mxu0 %v736
    %806 = vmatpush.msra.mxu0 %v732
    %807 = vmatpush.msra.mxu0 %v728
    %808 = vmatmul.f32.gmra.mxu0 %v140
    %v809 = vpop.f32.mrf.mxu0
    %v810 = vadd.f32 %v101, %v809
    %811 = vmatmul.f32.gmra.mxu0 %v143
    %v812 = vpop.f32.mrf.mxu0
    %v813 = vadd.f32 %v106, %v812
    %814 = vmatmul.f32.gmra.mxu0 %v146
    %v815 = vpop.f32.mrf.mxu0
    %v816 = vadd.f32 %v111, %v815
    %817 = vmatmul.f32.gmra.mxu0 %v149
    %v818 = vpop.f32.mrf.mxu0
    %v819 = vadd.f32 %v116, %v818
    %820 = vmatmul.f32.gmra.mxu0 %v152
    %v821 = vpop.f32.mrf.mxu0
    %v822 = vadd.f32 %v121, %v821
    %823 = vmatmul.f32.gmra.mxu0 %v155
    %v824 = vpop.f32.mrf.mxu0
    %v825 = vadd.f32 %v126, %v824
    %826 = vmatmul.f32.gmra.mxu0 %v158
    %v827 = vpop.f32.mrf.mxu0
    %v828 = vadd.f32 %v131, %v827
    %829 = vmatmul.f32.gmra.mxu0 %v161
    %v830 = vpop.f32.mrf.mxu0
    %v831 = vadd.f32 %v136, %v830
    %832 = vdwg.mxu0
    %833 = vmatpush.msra.mxu0 0.0
    %834 = vmatpush.msra.mxu0 0.0
    %835 = vmatpush.msra.mxu0 0.0
    %836 = vmatpush.msra.mxu0 0.0
    %837 = vmatpush.msra.mxu0 0.0
    %838 = vmatpush.msra.mxu0 0.0
    %839 = vmatpush.msra.mxu0 0.0
    %840 = vmatpush.msra.mxu0 0.0
    %841 = vmatpush.msra.mxu0 0.0
    %842 = vmatpush.msra.mxu0 0.0
    %843 = vmatpush.msra.mxu0 %v749
    %844 = vmatpush.msra.mxu0 %v745
    %845 = vmatpush.msra.mxu0 %v741
    %846 = vmatpush.msra.mxu0 %v737
    %847 = vmatpush.msra.mxu0 %v733
    %848 = vmatpush.msra.mxu0 %v729
    %849 = vmatmul.f32.gmra.mxu0 %v140
    %v850 = vpop.f32.mrf.mxu0
    %v851 = vadd.f32 %v101, %v850
    %852 = vmatmul.f32.gmra.mxu0 %v143
    %v853 = vpop.f32.mrf.mxu0
    %v854 = vadd.f32 %v106, %v853
    %855 = vmatmul.f32.gmra.mxu0 %v146
    %v856 = vpop.f32.mrf.mxu0
    %v857 = vadd.f32 %v111, %v856
    %858 = vmatmul.f32.gmra.mxu0 %v149
    %v859 = vpop.f32.mrf.mxu0
    %v860 = vadd.f32 %v116, %v859
    %861 = vmatmul.f32.gmra.mxu0 %v152
    %v862 = vpop.f32.mrf.mxu0
    %v863 = vadd.f32 %v121, %v862
    %864 = vmatmul.f32.gmra.mxu0 %v155
    %v865 = vpop.f32.mrf.mxu0
    %v866 = vadd.f32 %v126, %v865
    %867 = vmatmul.f32.gmra.mxu0 %v158
    %v868 = vpop.f32.mrf.mxu0
    %v869 = vadd.f32 %v131, %v868
    %870 = vmatmul.f32.gmra.mxu0 %v161
    %v871 = vpop.f32.mrf.mxu0
    %v872 = vadd.f32 %v136, %v871
    %873 = vdwg.mxu0
    %874 = vmatpush.msra.mxu0 0.0
    %875 = vmatpush.msra.mxu0 0.0
    %876 = vmatpush.msra.mxu0 0.0
    %877 = vmatpush.msra.mxu0 0.0
    %878 = vmatpush.msra.mxu0 0.0
    %879 = vmatpush.msra.mxu0 0.0
    %880 = vmatpush.msra.mxu0 0.0
    %881 = vmatpush.msra.mxu0 0.0
    %882 = vmatpush.msra.mxu0 0.0
    %883 = vmatpush.msra.mxu0 0.0
    %884 = vmatpush.msra.mxu0 %v750
    %885 = vmatpush.msra.mxu0 %v746
    %886 = vmatpush.msra.mxu0 %v742
    %887 = vmatpush.msra.mxu0 %v738
    %888 = vmatpush.msra.mxu0 %v734
    %889 = vmatpush.msra.mxu0 %v730
    %890 = vmatmul.f32.gmra.mxu0 %v140
    %v891 = vpop.f32.mrf.mxu0
    %v892 = vadd.f32 %v101, %v891
    %893 = vmatmul.f32.gmra.mxu0 %v143
    %v894 = vpop.f32.mrf.mxu0
    %v895 = vadd.f32 %v106, %v894
    %896 = vmatmul.f32.gmra.mxu0 %v146
    %v897 = vpop.f32.mrf.mxu0
    %v898 = vadd.f32 %v111, %v897
    %899 = vmatmul.f32.gmra.mxu0 %v149
    %v900 = vpop.f32.mrf.mxu0
    %v901 = vadd.f32 %v116, %v900
    %902 = vmatmul.f32.gmra.mxu0 %v152
    %v903 = vpop.f32.mrf.mxu0
    %v904 = vadd.f32 %v121, %v903
    %905 = vmatmul.f32.gmra.mxu0 %v155
    %v906 = vpop.f32.mrf.mxu0
    %v907 = vadd.f32 %v126, %v906
    %908 = vmatmul.f32.gmra.mxu0 %v158
    %v909 = vpop.f32.mrf.mxu0
    %v910 = vadd.f32 %v131, %v909
    %911 = vmatmul.f32.gmra.mxu0 %v161
    %v912 = vpop.f32.mrf.mxu0
    %v913 = vadd.f32 %v136, %v912
    %914 = vdwg.mxu0
    %v915 = vmax.f32 %v769, 0.0
    %v916 = vmax.f32 %v810, 0.0
    %v917 = vmax.f32 %v851, 0.0
    %v918 = vmax.f32 %v892, 0.0
    %v919 = vmax.f32 %v772, 0.0
    %v920 = vmax.f32 %v813, 0.0
    %v921 = vmax.f32 %v854, 0.0
    %v922 = vmax.f32 %v895, 0.0
    %v923 = vmax.f32 %v775, 0.0
    %v924 = vmax.f32 %v816, 0.0
    %v925 = vmax.f32 %v857, 0.0
    %v926 = vmax.f32 %v898, 0.0
    %v927 = vmax.f32 %v778, 0.0
    %v928 = vmax.f32 %v819, 0.0
    %v929 = vmax.f32 %v860, 0.0
    %v930 = vmax.f32 %v901, 0.0
    %v931 = vmax.f32 %v781, 0.0
    %v932 = vmax.f32 %v822, 0.0
    %v933 = vmax.f32 %v863, 0.0
    %v934 = vmax.f32 %v904, 0.0
    %v935 = vmax.f32 %v784, 0.0
    %v936 = vmax.f32 %v825, 0.0
    %v937 = vmax.f32 %v866, 0.0
    %v938 = vmax.f32 %v907, 0.0
    %v939 = vmax.f32 %v787, 0.0
    %v940 = vmax.f32 %v828, 0.0
    %v941 = vmax.f32 %v869, 0.0
    %v942 = vmax.f32 %v910, 0.0
    %v943 = vmax.f32 %v790, 0.0
    %v944 = vmax.f32 %v831, 0.0
    %v945 = vmax.f32 %v872, 0.0
    %v946 = vmax.f32 %v913, 0.0
    %947 = vmatpush.msra.mxu0 0.0
    %948 = vmatpush.msra.mxu0 0.0
    %949 = vmatpush.msra.mxu0 0.0
    %950 = vmatpush.msra.mxu0 0.0
    %951 = vmatpush.msra.mxu0 0.0
    %952 = vmatpush.msra.mxu0 0.0
    %953 = vmatpush.msra.mxu0 0.0
    %954 = vmatpush.msra.mxu0 0.0
    %955 = vmatpush.msra.mxu0 %v943
    %956 = vmatpush.msra.mxu0 %v939
    %957 = vmatpush.msra.mxu0 %v935
    %958 = vmatpush.msra.mxu0 %v931
    %959 = vmatpush.msra.mxu0 %v927
    %960 = vmatpush.msra.mxu0 %v923
    %961 = vmatpush.msra.mxu0 %v919
    %962 = vmatpush.msra.mxu0 %v915
    %963 = vmatmul.f32.gmra.mxu0 %v401
    %v964 = vpop.f32.mrf.mxu0
    %v965 = vadd.f32 %v362, %v964
    %966 = vmatmul.f32.gmra.mxu0 %v404
    %v967 = vpop.f32.mrf.mxu0
    %v968 = vadd.f32 %v367, %v967
    %969 = vmatmul.f32.gmra.mxu0 %v407
    %v970 = vpop.f32.mrf.mxu0
    %v971 = vadd.f32 %v372, %v970
    %972 = vmatmul.f32.gmra.mxu0 %v410
    %v973 = vpop.f32.mrf.mxu0
    %v974 = vadd.f32 %v377, %v973
    %975 = vmatmul.f32.gmra.mxu0 %v413
    %v976 = vpop.f32.mrf.mxu0
    %v977 = vadd.f32 %v382, %v976
    %978 = vmatmul.f32.gmra.mxu0 %v416
    %v979 = vpop.f32.mrf.mxu0
    %v980 = vadd.f32 %v387, %v979
    %981 = vmatmul.f32.gmra.mxu0 %v419
    %v982 = vpop.f32.mrf.mxu0
    %v983 = vadd.f32 %v392, %v982
    %984 = vmatmul.f32.gmra.mxu0 %v422
    %v985 = vpop.f32.mrf.mxu0
    %v986 = vadd.f32 %v397, %v985
    %987 = vdwg.mxu0
    %988 = vmatpush.msra.mxu0 0.0
    %989 = vmatpush.msra.mxu0 0.0
    %990 = vmatpush.msra.mxu0 0.0
    %991 = vmatpush.msra.mxu0 0.0
    %992 = vmatpush.msra.mxu0 0.0
    %993 = vmatpush.msra.mxu0 0.0
    %994 = vmatpush.msra.mxu0 0.0
    %995 = vmatpush.msra.mxu0 0.0
    %996 = vmatpush.msra.mxu0 %v944
    %997 = vmatpush.msra.mxu0 %v940
    %998 = vmatpush.msra.mxu0 %v936
    %999 = vmatpush.msra.mxu0 %v932
    %1000 = vmatpush.msra.mxu0 %v928
    %1001 = vmatpush.msra.mxu0 %v924
    %1002 = vmatpush.msra.mxu0 %v920
    %1003 = vmatpush.msra.mxu0 %v916
    %1004 = vmatmul.f32.gmra.mxu0 %v401
    %v1005 = vpop.f32.mrf.mxu0
    %v1006 = vadd.f32 %v362, %v1005
    %1007 = vmatmul.f32.gmra.mxu0 %v404
    %v1008 = vpop.f32.mrf.mxu0
    %v1009 = vadd.f32 %v367, %v1008
    %1010 = vmatmul.f32.gmra.mxu0 %v407
    %v1011 = vpop.f32.mrf.mxu0
    %v1012 = vadd.f32 %v372, %v1011
    %1013 = vmatmul.f32.gmra.mxu0 %v410
    %v1014 = vpop.f32.mrf.mxu0
    %v1015 = vadd.f32 %v377, %v1014
    %1016 = vmatmul.f32.gmra.mxu0 %v413
    %v1017 = vpop.f32.mrf.mxu0
    %v1018 = vadd.f32 %v382, %v1017
    %1019 = vmatmul.f32.gmra.mxu0 %v416
    %v1020 = vpop.f32.mrf.mxu0
    %v1021 = vadd.f32 %v387, %v1020
    %1022 = vmatmul.f32.gmra.mxu0 %v419
    %v1023 = vpop.f32.mrf.mxu0
    %v1024 = vadd.f32 %v392, %v1023
    %1025 = vmatmul.f32.gmra.mxu0 %v422
    %v1026 = vpop.f32.mrf.mxu0
    %v1027 = vadd.f32 %v397, %v1026
    %1028 = vdwg.mxu0
    %1029 = vmatpush.msra.mxu0 0.0
    %1030 = vmatpush.msra.mxu0 0.0
    %1031 = vmatpush.msra.mxu0 0.0
    %1032 = vmatpush.msra.mxu0 0.0
    %1033 = vmatpush.msra.mxu0 0.0
    %1034 = vmatpush.msra.mxu0 0.0
    %1035 = vmatpush.msra.mxu0 0.0
    %1036 = vmatpush.msra.mxu0 0.0
    %1037 = vmatpush.msra.mxu0 %v945
    %1038 = vmatpush.msra.mxu0 %v941
    %1039 = vmatpush.msra.mxu0 %v937
    %1040 = vmatpush.msra.mxu0 %v933
    %1041 = vmatpush.msra.mxu0 %v929
    %1042 = vmatpush.msra.mxu0 %v925
    %1043 = vmatpush.msra.mxu0 %v921
    %1044 = vmatpush.msra.mxu0 %v917
    %1045 = vmatmul.f32.gmra.mxu0 %v401
    %v1046 = vpop.f32.mrf.mxu0
    %v1047 = vadd.f32 %v362, %v1046
    %1048 = vmatmul.f32.gmra.mxu0 %v404
    %v1049 = vpop.f32.mrf.mxu0
    %v1050 = vadd.f32 %v367, %v1049
    %1051 = vmatmul.f32.gmra.mxu0 %v407
    %v1052 = vpop.f32.mrf.mxu0
    %v1053 = vadd.f32 %v372, %v1052
    %1054 = vmatmul.f32.gmra.mxu0 %v410
    %v1055 = vpop.f32.mrf.mxu0
    %v1056 = vadd.f32 %v377, %v1055
    %1057 = vmatmul.f32.gmra.mxu0 %v413
    %v1058 = vpop.f32.mrf.mxu0
    %v1059 = vadd.f32 %v382, %v1058
    %1060 = vmatmul.f32.gmra.mxu0 %v416
    %v1061 = vpop.f32.mrf.mxu0
    %v1062 = vadd.f32 %v387, %v1061
    %1063 = vmatmul.f32.gmra.mxu0 %v419
    %v1064 = vpop.f32.mrf.mxu0
    %v1065 = vadd.f32 %v392, %v1064
    %1066 = vmatmul.f32.gmra.mxu0 %v422
    %v1067 = vpop.f32.mrf.mxu0
    %v1068 = vadd.f32 %v397, %v1067
    %1069 = vdwg.mxu0
    %1070 = vmatpush.msra.mxu0 0.0
    %1071 = vmatpush.msra.mxu0 0.0
    %1072 = vmatpush.msra.mxu0 0.0
    %1073 = vmatpush.msra.mxu0 0.0
    %1074 = vmatpush.msra.mxu0 0.0
    %1075 = vmatpush.msra.mxu0 0.0
    %1076 = vmatpush.msra.mxu0 0.0
    %1077 = vmatpush.msra.mxu0 0.0
    %1078 = vmatpush.msra.mxu0 %v946
    %1079 = vmatpush.msra.mxu0 %v942
    %1080 = vmatpush.msra.mxu0 %v938
    %1081 = vmatpush.msra.mxu0 %v934
    %1082 = vmatpush.msra.mxu0 %v930
    %1083 = vmatpush.msra.mxu0 %v926
    %1084 = vmatpush.msra.mxu0 %v922
    %1085 = vmatpush.msra.mxu0 %v918
    %1086 = vmatmul.f32.gmra.mxu0 %v401
    %v1087 = vpop.f32.mrf.mxu0
    %v1088 = vadd.f32 %v362, %v1087
    %1089 = vmatmul.f32.gmra.mxu0 %v404
    %v1090 = vpop.f32.mrf.mxu0
    %v1091 = vadd.f32 %v367, %v1090
    %1092 = vmatmul.f32.gmra.mxu0 %v407
    %v1093 = vpop.f32.mrf.mxu0
    %v1094 = vadd.f32 %v372, %v1093
    %1095 = vmatmul.f32.gmra.mxu0 %v410
    %v1096 = vpop.f32.mrf.mxu0
    %v1097 = vadd.f32 %v377, %v1096
    %1098 = vmatmul.f32.gmra.mxu0 %v413
    %v1099 = vpop.f32.mrf.mxu0
    %v1100 = vadd.f32 %v382, %v1099
    %1101 = vmatmul.f32.gmra.mxu0 %v416
    %v1102 = vpop.f32.mrf.mxu0
    %v1103 = vadd.f32 %v387, %v1102
    %1104 = vmatmul.f32.gmra.mxu0 %v419
    %v1105 = vpop.f32.mrf.mxu0
    %v1106 = vadd.f32 %v392, %v1105
    %1107 = vmatmul.f32.gmra.mxu0 %v422
    %v1108 = vpop.f32.mrf.mxu0
    %v1109 = vadd.f32 %v397, %v1108
    %1110 = vdwg.mxu0
    %v1111 = vmax.f32 %v965, 0.0
    %v1112 = vmax.f32 %v1006, 0.0
    %v1113 = vmax.f32 %v1047, 0.0
    %v1114 = vmax.f32 %v1088, 0.0
    %v1115 = vmax.f32 %v968, 0.0
    %v1116 = vmax.f32 %v1009, 0.0
    %v1117 = vmax.f32 %v1050, 0.0
    %v1118 = vmax.f32 %v1091, 0.0
    %v1119 = vmax.f32 %v971, 0.0
    %v1120 = vmax.f32 %v1012, 0.0
    %v1121 = vmax.f32 %v1053, 0.0
    %v1122 = vmax.f32 %v1094, 0.0
    %v1123 = vmax.f32 %v974, 0.0
    %v1124 = vmax.f32 %v1015, 0.0
    %v1125 = vmax.f32 %v1056, 0.0
    %v1126 = vmax.f32 %v1097, 0.0
    %v1127 = vmax.f32 %v977, 0.0
    %v1128 = vmax.f32 %v1018, 0.0
    %v1129 = vmax.f32 %v1059, 0.0
    %v1130 = vmax.f32 %v1100, 0.0
    %v1131 = vmax.f32 %v980, 0.0
    %v1132 = vmax.f32 %v1021, 0.0
    %v1133 = vmax.f32 %v1062, 0.0
    %v1134 = vmax.f32 %v1103, 0.0
    %v1135 = vmax.f32 %v983, 0.0
    %v1136 = vmax.f32 %v1024, 0.0
    %v1137 = vmax.f32 %v1065, 0.0
    %v1138 = vmax.f32 %v1106, 0.0
    %v1139 = vmax.f32 %v986, 0.0
    %v1140 = vmax.f32 %v1027, 0.0
    %v1141 = vmax.f32 %v1068, 0.0
    %v1142 = vmax.f32 %v1109, 0.0
    %1143 = vmatpush.msra.mxu0 0.0
    %1144 = vmatpush.msra.mxu0 0.0
    %1145 = vmatpush.msra.mxu0 0.0
    %1146 = vmatpush.msra.mxu0 0.0
    %1147 = vmatpush.msra.mxu0 0.0
    %1148 = vmatpush.msra.mxu0 0.0
    %1149 = vmatpush.msra.mxu0 0.0
    %1150 = vmatpush.msra.mxu0 0.0
    %1151 = vmatpush.msra.mxu0 %v1139
    %1152 = vmatpush.msra.mxu0 %v1135
    %1153 = vmatpush.msra.mxu0 %v1131
    %1154 = vmatpush.msra.mxu0 %v1127
    %1155 = vmatpush.msra.mxu0 %v1123
    %1156 = vmatpush.msra.mxu0 %v1119
    %1157 = vmatpush.msra.mxu0 %v1115
    %1158 = vmatpush.msra.mxu0 %v1111
    %1159 = vmatmul.f32.gmra.mxu0 %v621
    %v1160 = vpop.f32.mrf.mxu0
    %v1161 = vadd.f32 0.0, %v1160
    %1162 = vmatmul.f32.gmra.mxu0 %v624
    %v1163 = vpop.f32.mrf.mxu0
    %v1164 = vadd.f32 0.0, %v1163
    %1165 = vdwg.mxu0
    %1166 = vmatpush.msra.mxu0 0.0
    %1167 = vmatpush.msra.mxu0 0.0
    %1168 = vmatpush.msra.mxu0 0.0
    %1169 = vmatpush.msra.mxu0 0.0
    %1170 = vmatpush.msra.mxu0 0.0
    %1171 = vmatpush.msra.mxu0 0.0
    %1172 = vmatpush.msra.mxu0 0.0
    %1173 = vmatpush.msra.mxu0 0.0
    %1174 = vmatpush.msra.mxu0 %v1140
    %1175 = vmatpush.msra.mxu0 %v1136
    %1176 = vmatpush.msra.mxu0 %v1132
    %1177 = vmatpush.msra.mxu0 %v1128
    %1178 = vmatpush.msra.mxu0 %v1124
    %1179 = vmatpush.msra.mxu0 %v1120
    %1180 = vmatpush.msra.mxu0 %v1116
    %1181 = vmatpush.msra.mxu0 %v1112
    %1182 = vmatmul.f32.gmra.mxu0 %v621
    %v1183 = vpop.f32.mrf.mxu0
    %v1184 = vadd.f32 0.0, %v1183
    %1185 = vmatmul.f32.gmra.mxu0 %v624
    %v1186 = vpop.f32.mrf.mxu0
    %v1187 = vadd.f32 0.0, %v1186
    %1188 = vdwg.mxu0
    %1189 = vmatpush.msra.mxu0 0.0
    %1190 = vmatpush.msra.mxu0 0.0
    %1191 = vmatpush.msra.mxu0 0.0
    %1192 = vmatpush.msra.mxu0 0.0
    %1193 = vmatpush.msra.mxu0 0.0
    %1194 = vmatpush.msra.mxu0 0.0
    %1195 = vmatpush.msra.mxu0 0.0
    %1196 = vmatpush.msra.mxu0 0.0
    %1197 = vmatpush.msra.mxu0 %v1141
    %1198 = vmatpush.msra.mxu0 %v1137
    %1199 = vmatpush.msra.mxu0 %v1133
    %1200 = vmatpush.msra.mxu0 %v1129
    %1201 = vmatpush.msra.mxu0 %v1125
    %1202 = vmatpush.msra.mxu0 %v1121
    %1203 = vmatpush.msra.mxu0 %v1117
    %1204 = vmatpush.msra.mxu0 %v1113
    %1205 = vmatmul.f32.gmra.mxu0 %v621
    %v1206 = vpop.f32.mrf.mxu0
    %v1207 = vadd.f32 0.0, %v1206
    %1208 = vmatmul.f32.gmra.mxu0 %v624
    %v1209 = vpop.f32.mrf.mxu0
    %v1210 = vadd.f32 0.0, %v1209
    %1211 = vdwg.mxu0
    %1212 = vmatpush.msra.mxu0 0.0
    %1213 = vmatpush.msra.mxu0 0.0
    %1214 = vmatpush.msra.mxu0 0.0
    %1215 = vmatpush.msra.mxu0 0.0
    %1216 = vmatpush.msra.mxu0 0.0
    %1217 = vmatpush.msra.mxu0 0.0
    %1218 = vmatpush.msra.mxu0 0.0
    %1219 = vmatpush.msra.mxu0 0.0
    %1220 = vmatpush.msra.mxu0 %v1142
    %1221 = vmatpush.msra.mxu0 %v1138
    %1222 = vmatpush.msra.mxu0 %v1134
    %1223 = vmatpush.msra.mxu0 %v1130
    %1224 = vmatpush.msra.mxu0 %v1126
    %1225 = vmatpush.msra.mxu0 %v1122
    %1226 = vmatpush.msra.mxu0 %v1118
    %1227 = vmatpush.msra.mxu0 %v1114
    %1228 = vmatmul.f32.gmra.mxu0 %v621
    %v1229 = vpop.f32.mrf.mxu0
    %v1230 = vadd.f32 0.0, %v1229
    %1231 = vmatmul.f32.gmra.mxu0 %v624
    %v1232 = vpop.f32.mrf.mxu0
    %v1233 = vadd.f32 0.0, %v1232
    %1234 = vdwg.mxu0
    %s1235 = scalar_lea.vmem [#allocation5], 64
    %1236 = vst [vmem:[%s1235] sm:$0xff] %v1161
    %1237 = vst [vmem:[%s1235 + $0x8] sm:$0xff] %v1184
    %1238 = vst [vmem:[%s1235 + $0x10] sm:$0xff] %v1207
    %1239 = vst [vmem:[%s1235 + $0x18] sm:$0xff] %v1230
    %1240 = vst [vmem:[%s1235 + $0x20] sm:$0xff] %v1164
    %1241 = vst [vmem:[%s1235 + $0x28] sm:$0xff] %v1187
    %1242 = vst [vmem:[%s1235 + $0x30] sm:$0xff] %v1210
    %1243 = vst [vmem:[%s1235 + $0x38] sm:$0xff] %v1233
    // Predicated region
    $region30: #{tpu_custom_call.1} parent=1 // pred_check
      _
    $region31: #{tpu_custom_call.1} parent=1 // pred_check_branch
      %1245 = sbr.rel (0) target = $region33
    $region32: #{tpu_custom_call.1} parent=1 // pred_region
      %1247 = vsyncadd [#allocation4], 0
      %s1248 = sshll.u32 [#allocation5], 4
      %s1249 = int_to_ptr.vmem [resolvable:$true] %s1248
      %s1250 = sshll.u32 %s6, 4
      %s1251 = int_to_ptr.hbm [resolvable:$true] %s1250
      %1256 = dma.vmem_to_hbm [thread:$0]  %s1249, 2048, %s1251, [#allocation4], 512, 512, 32
    $region33: #{tpu_custom_call.1} parent=1 // pred_fallthru
      _
    // Predicated region
    $region34: #{tpu_custom_call.1} parent=1 // pred_check
      _
    $region35: #{tpu_custom_call.1} parent=1 // pred_check_branch
      %1258 = sbr.rel (0) target = $region37
    $region36: #{tpu_custom_call.1} parent=1 // pred_region
      %1260 = dma.done [#allocation4], 2048
    $region37: #{tpu_custom_call.1} parent=1 // pred_fallthru
      _
    %1261 = vsyncpa [#allocation3], 1
    %1262 = vsyncpa [#allocation4], 1

</llo_original>
